<compile_context>
chip_gen: v7x
topology: tpu7x:2x2x1
jax: 0.10.0
libtpu: 0.0.40
codegen_flags: <defaults>
</compile_context>

<pallas_src>
import jax
import jax.numpy as jnp
from jax.experimental import pallas as pl
from jax.experimental.pallas import tpu as pltpu


def _patch_embed_kernel(p_ref, w_ref, add_ref, o_ref):
    """One grid step == G batch elements.

    p_ref  : (G, Tp, Kp)  bf16  im2col'd patches; row 0 of each image is the
                                zero cls slot, trailing rows/cols are zero pad
    w_ref  : (Kp, E)      bf16  conv weight, flattened + transposed + K-padded
    add_ref: (Tp, E)      f32   row 0 = cls_tkn + pos_emb[0];
                                rows 1..Np = conv_bias + pos_emb[1:]; rest 0
    o_ref  : (G, Tp, E)   f32
    """
    G, Tp, Kp = p_ref.shape
    E = w_ref.shape[1]
    # (G, Tp) merge is layout-preserving (Tp % 8 == 0, Kp % 128 == 0) -> free.
    proj = jnp.dot(p_ref[...].reshape(G * Tp, Kp), w_ref[...],
                   preferred_element_type=jnp.float32).reshape(G, Tp, E)
    o_ref[...] = (proj + add_ref[...]).astype(o_ref.dtype)
    # TODO(synk): nn.Dropout(emb_dropout) is identity in eval mode; not modeled.


def _round_up(v, m):
    return (v + m - 1) // m * m


def _choose_group(B, Tp, Kp, E, budget_bytes=12 << 20, max_rows=2048):
    """Largest G dividing B s.t. blocks fit a conservative VMEM budget and the
    grid keeps >= 2 steps (so v7x's two TCs are both fed)."""
    best = 1
    for G in range(1, B + 1):
        if B % G:
            continue
        if B > 1 and B // G < 2:
            continue
        step_bytes = (2 * (G * Tp * Kp * 2 + G * Tp * E * 4)   # dbl-buffered in/out
                      + Kp * E * 2 + Tp * E * 4)               # resident w / slab
        if step_bytes > budget_bytes or G * Tp > max_rows:
            continue
        best = G
    return best


def patch_embedding_forward(x, w_conv, b_conv, cls_tkn, pos_emb, patch_size):
    """x: (B, C, H, W). Parameters in PyTorch convention:
       w_conv: (E, C, P, P), b_conv: (E,), cls_tkn: (1, 1, E),
       pos_emb: (1, Np + 1, E)."""
    B, C, H, W = x.shape
    P = patch_size
    E = w_conv.shape[0]
    Hp, Wp = H // P, W // P
    Np = Hp * Wp
    T = Np + 1
    K = C * P * P

    Kp = _round_up(K, 128)   # lane / MXU contraction dim
    Tp = _round_up(T, 16)    # sublane dim (bf16 packing granularity)

    # ---- plain-JAX layout plumbing -----------------------------------------
    # patches[b, h*Wp + w, :] = x[b, :, h*P:(h+1)*P, w*P:(w+1)*P].ravel()  (c,ph,pw)
    patches = (x.reshape(B, C, Hp, P, Wp, P)
                 .transpose(0, 2, 4, 1, 3, 5)
                 .reshape(B, Np, K))
    # One-shot pad: 1 leading zero row (cls slot), Tp-T trailing zero rows,
    # Kp-K zero lanes.  bf16 for the MXU.
    patches_ext = jnp.pad(
        patches, ((0, 0), (1, Tp - T), (0, Kp - K))).astype(jnp.bfloat16)

    # Weight: (E, C, P, P) -> (K, E), zero-pad contraction dim, bf16.
    w_t = jnp.pad(w_conv.reshape(E, K).T,
                  ((0, Kp - K), (0, 0))).astype(jnp.bfloat16)

    # Fold conv bias, cls token and positional embedding into one f32 slab.
    add_slab = jnp.concatenate(
        [cls_tkn.reshape(1, E),
         jnp.broadcast_to(b_conv.reshape(1, E), (Np, E))],
        axis=0) + pos_emb[0]                                   # (T, E)
    add_slab = jnp.pad(add_slab, ((0, Tp - T), (0, 0))).astype(jnp.float32)

    G = _choose_group(B, Tp, Kp, E)
    grid = (B // G,)
    full2 = lambda b: (0, 0)

    out = pl.pallas_call(
        _patch_embed_kernel,
        out_shape=jax.ShapeDtypeStruct((B, Tp, E), x.dtype),
        grid_spec=pltpu.PrefetchScalarGridSpec(
            num_scalar_prefetch=0,
            grid=grid,
            in_specs=[
                pl.BlockSpec((G, Tp, Kp), lambda b: (b, 0, 0)),  # patch stream
                pl.BlockSpec((Kp, E), full2),                    # W^T (resident)
                pl.BlockSpec((Tp, E), full2),                    # add slab (resident)
            ],
            out_specs=pl.BlockSpec((G, Tp, E), lambda b: (b, 0, 0)),
        ),
        compiler_params=pltpu.CompilerParams(
            dimension_semantics=("parallel",),
            vmem_limit_bytes=48 << 20),
    )(patches_ext, w_t, add_slab)

    # Slice off the T padding (rows Np+1 .. Tp-1).
    return out[:, :T, :]


def _reference(x, w_conv, b_conv, cls_tkn, pos_emb, patch_size):
    """Pure-JAX f32 reference mirroring the PyTorch forward (eval mode)."""
    B, C, H, W = x.shape
    E = w_conv.shape[0]
    y = jax.lax.conv_general_dilated(
        x, w_conv, window_strides=(patch_size, patch_size), padding="VALID",
        dimension_numbers=("NCHW", "OIHW", "NCHW"),
        precision=jax.lax.Precision.HIGHEST)
    y = y + b_conv.reshape(1, E, 1, 1)
    Hp, Wp = y.shape[2], y.shape[3]
    y = y.reshape(B, E, Hp * Wp).transpose(0, 2, 1)   # b c (h w) -> b (h w) c
    cls = jnp.broadcast_to(cls_tkn, (B, 1, E))
    return jnp.concatenate([cls, y], axis=1) + pos_emb


if __name__ == "__main__":
    B, C, IMG, P, E = 2, 4, 16, 4, 128          # batch, channels, image, patch, emb
    Np = (IMG // P) * (IMG // P)                # 16 patches -> 17 tokens with cls

    key = jax.random.PRNGKey(0)
    kx, k1, k2, k3, k4 = jax.random.split(key, 5)

    x = jax.random.normal(kx, (B, C, IMG, IMG), dtype=jnp.float32)
    # Deterministic synthetic parameters (PyTorch shapes).
    w_conv = 0.05 * jax.random.normal(k1, (E, C, P, P), dtype=jnp.float32)
    b_conv = 0.05 * jax.random.normal(k2, (E,), dtype=jnp.float32)
    cls_tkn = jax.random.normal(k3, (1, 1, E), dtype=jnp.float32)
    pos_emb = jax.random.normal(k4, (1, Np + 1, E), dtype=jnp.float32)

    out = patch_embedding_forward(x, w_conv, b_conv, cls_tkn, pos_emb, P)
    out = jax.block_until_ready(out)

    ref = _reference(x, w_conv, b_conv, cls_tkn, pos_emb, P)
    assert out.shape == (B, Np + 1, E)
    # bf16 matmul operands vs. f32 HIGHEST-precision reference -> loosened tol.
    assert jnp.allclose(out, ref, atol=5e-2, rtol=5e-2), float(
        jnp.max(jnp.abs(out - ref)))

    print("KERNEL_OK")
</pallas_src>

<mosaic_0001>
module attributes {stable_mosaic.version = 11 : i64} {
  func.func @_patch_embed_kernel(%arg0: i32, %arg1: memref<1x32x128xbf16, #tpu.memory_space<vmem>>, %arg2: memref<128x128xbf16, #tpu.memory_space<vmem>>, %arg3: memref<32x128xf32, #tpu.memory_space<vmem>>, %arg4: memref<1x32x128xf32, #tpu.memory_space<vmem>>) attributes {dimension_semantics = [#tpu.dimension_semantics<parallel>], iteration_bounds = array<i64: 2>, scalar_prefetch = 0 : i64, scratch_operands = 0 : i64, tpu.core_type = #tpu.core_type<tc>, window_params = [{transform_indices = @transform_0, window_bounds = array<i64: 1, 32, 128>}, {pipeline_mode = #tpu.pipeline_mode<synchronous>, transform_indices = @transform_1, window_bounds = array<i64: 128, 128>}, {pipeline_mode = #tpu.pipeline_mode<synchronous>, transform_indices = @transform_2, window_bounds = array<i64: 32, 128>}, {transform_indices = @transform_3, window_bounds = array<i64: 1, 32, 128>}]} {
    %c0 = arith.constant 0 : index
    %c0_0 = arith.constant 0 : index
    %c0_1 = arith.constant 0 : index
    %0 = vector.load %arg1[%c0, %c0_0, %c0_1] : memref<1x32x128xbf16, #tpu.memory_space<vmem>>, vector<1x32x128xbf16>
    %1 = vector.shape_cast %0 : vector<1x32x128xbf16> to vector<32x128xbf16>
    %c0_2 = arith.constant 0 : index
    %c0_3 = arith.constant 0 : index
    %2 = vector.load %arg2[%c0_2, %c0_3] : memref<128x128xbf16, #tpu.memory_space<vmem>>, vector<128x128xbf16>
    %cst = arith.constant dense<0.000000e+00> : vector<32x128xf32>
    %3 = tpu.matmul %1, %2, %cst {dimension_numbers = #tpu.dot_dimension_numbers<[1], [0], [0], [1], [0, 0, 1, 1], [], []>} : vector<32x128xbf16>, vector<128x128xbf16>, vector<32x128xf32> -> vector<32x128xf32>
    %4 = vector.shape_cast %3 : vector<32x128xf32> to vector<1x32x128xf32>
    %c0_4 = arith.constant 0 : index
    %c0_5 = arith.constant 0 : index
    %5 = vector.load %arg3[%c0_4, %c0_5] : memref<32x128xf32, #tpu.memory_space<vmem>>, vector<32x128xf32>
    %6 = vector.shape_cast %5 : vector<32x128xf32> to vector<1x32x128xf32>
    %7 = arith.addf %4, %6 : vector<1x32x128xf32>
    %c0_6 = arith.constant 0 : index
    %c0_7 = arith.constant 0 : index
    %c0_8 = arith.constant 0 : index
    %8 = vector.load %arg4[%c0_6, %c0_7, %c0_8] : memref<1x32x128xf32, #tpu.memory_space<vmem>>, vector<1x32x128xf32>
    tpu.vector_store %arg4[%c0_6, %c0_7, %c0_8], %7 {strides = array<i32>} : memref<1x32x128xf32, #tpu.memory_space<vmem>>, vector<1x32x128xf32>,
    return
  }
  func.func @transform_0(%arg0: i32) -> (i32, i32, i32) {
    %c0_i32 = arith.constant 0 : i32
    %c0_i32_0 = arith.constant 0 : i32
    %c0_i32_1 = arith.constant 0 : i32
    return %arg0, %c0_i32, %c0_i32_0 : i32, i32, i32
  }
  func.func @transform_1(%arg0: i32) -> (i32, i32) {
    %c0_i32 = arith.constant 0 : i32
    %c0_i32_0 = arith.constant 0 : i32
    %c0_i32_1 = arith.constant 0 : i32
    return %c0_i32, %c0_i32_0 : i32, i32
  }
  func.func @transform_2(%arg0: i32) -> (i32, i32) {
    %c0_i32 = arith.constant 0 : i32
    %c0_i32_0 = arith.constant 0 : i32
    %c0_i32_1 = arith.constant 0 : i32
    return %c0_i32, %c0_i32_0 : i32, i32
  }
  func.func @transform_3(%arg0: i32) -> (i32, i32, i32) {
    %c0_i32 = arith.constant 0 : i32
    %c0_i32_0 = arith.constant 0 : i32
    %c0_i32_1 = arith.constant 0 : i32
    return %arg0, %c0_i32, %c0_i32_0 : i32, i32, i32
  }
}

</mosaic_0001>

<llo_original>
// kernel: tpu_custom_call.1
$region0: #{tpu_custom_call.1}
  #allocation0 [shape = 'u32[]', space=smem, size = 0x4, offset = 0x4, fixed_abs, tag = 'smem constant byte address 0x4 - core index']
  #allocation1 [shape = 'u32[144,128]{1,0:T(1,128)}', space=vmem, size = 0x12000, scoped, tag = 'internal scratch']
  %s0 = inlined_call_operand.hbm [shape: bf16[2,32,128], index: 0, kind: input, shape index: {}]
  %s1 = inlined_call_operand.hbm [shape: bf16[128,128], index: 1, kind: input, shape index: {}]
  %s2 = inlined_call_operand.hbm [shape: f32[32,128], index: 2, kind: input, shape index: {}]
  %s3 = inlined_call_operand.hbm [shape: f32[2,32,128], index: 3, kind: output, shape index: {}]
  %s4 = sld [smem:[#allocation0]]
  $region57: #{tpu_custom_call.1} parent=0
    _
  %s6 = ssub.s32 1, %s4
  %s7 = scalar_select 0, %s6, %s4
  $region1: #{tpu_custom_call.1} parent=0
    #allocation2 [shape = 'u8[16384]{0}', space=vmem, size = 0x4000, scoped, tag = 'input window, operand 0']
    #allocation3 [shape = 's32[2]{0}', space=sflag, size = 0x8, scoped, tag = 'scoped memory for tpu_custom_call.1']
    #allocation4 [shape = 's32[2]{0}', space=sflag, size = 0x8, scoped, tag = 'scoped memory for tpu_custom_call.1']
    #allocation5 [shape = 'u8[32768]{0}', space=vmem, size = 0x8000, scoped, tag = 'input window, operand 1, single buffered']
    #allocation6 [shape = 's32[1]{0}', space=sflag, size = 0x4, scoped, tag = 'scoped memory for tpu_custom_call.1']
    #allocation7 [shape = 'u8[16384]{0}', space=vmem, size = 0x4000, scoped, tag = 'input window, operand 2, single buffered']
    #allocation8 [shape = 'u8[32768]{0}', space=vmem, size = 0x8000, scoped, tag = 'output window, operand 0']
    %8 = vsyncpa [#allocation3], 0
    %s9 = scalar_lea.sflag [#allocation3], 1
    %10 = vsyncpa %s9, 0
    %11 = vsyncpa [#allocation6], 0
    %12 = vsyncpa [#allocation4], 0
    %s13 = scalar_lea.sflag [#allocation4], 1
    %14 = vsyncpa %s13, 0
    loop: start=0, step=1, limit=4
    $region2: #{tpu_custom_call.1} parent=1 // loop_pre_header
      _
    $region3: #{tpu_custom_call.1} parent=1 // loop_header
      %s16 = sphi 0, %s20
      %p17 = scmp.ge.s32.totalorder %s16, 4
      %s26 = sphi 0, %s28
      %s29 = sphi 0, %s26
      %s30 = sphi 0, %s29
      %s46 = sphi 0, %s30
      %s50 = sphi 0, %s50
      %s52 = sphi 0, %s50
      %s53 = sphi 0, %s52
      %s67 = sphi 0, %s53
      %s71 = sphi 0, %s71
      %s73 = sphi 0, %s71
      %s74 = sphi 0, %s73
      %s88 = sphi 0, %s74
      %s94 = sphi 0, %s96
      %s97 = sphi 0, %s94
      %s98 = sphi 0, %s97
      %s114 = sphi 0, %s98
    $region4: #{tpu_custom_call.1} parent=1 // loop_header_branch
      %19 = sbr.rel (%p17) target = $region8
    $region5: #{tpu_custom_call.1} parent=1 // loop_body
      %s21 = ssub.s32 %s16, 1
      %s22 = ssub.s32 %s16, 2
      %s23 = sadd.s32 %s16, 1
      %s24 = ssub.s32 %s16, %s23
      %p25 = scmp.eq.s32.totalorder %s24, 0
      %s27 = sadd.s32 %s26, 1
      %s28 = scalar_select %p25, %s26, %s27
      %p31 = pneg %p25
      %p32 = scmp.eq.s32.totalorder %s16, 1
      %p33 = por %p31, %p32
      %p34 = scmp.ne.s32.totalorder %s26, %s29
      %p35 = scmp.eq.s32.totalorder %s16, 0
      %p36 = por %p34, %p35
      %p37 = scmp.ne.s32.totalorder %s26, %s29
      %p38 = scmp.eq.s32.totalorder %s21, 1
      %p39 = por %p37, %p38
      %p40 = scmp.ne.s32.totalorder %s29, %s30
      %p41 = scmp.eq.s32.totalorder %s21, 0
      %p42 = por %p40, %p41
      %p43 = scmp.ne.s32.totalorder %s29, %s30
      %p44 = scmp.eq.s32.totalorder %s22, 1
      %p45 = por %p43, %p44
      %p47 = scmp.ne.s32.totalorder %s30, %s46
      %p48 = scmp.eq.s32.totalorder %s22, 0
      %p49 = por %p47, %p48
      %s51 = sadd.s32 %s50, 1
      %p54 = scmp.eq.s32.totalorder %s16, 1
      %p55 = scmp.ne.s32.totalorder %s50, %s52
      %p56 = scmp.eq.s32.totalorder %s16, 0
      %p57 = por %p55, %p56
      %p58 = scmp.ne.s32.totalorder %s50, %s52
      %p59 = scmp.eq.s32.totalorder %s21, 1
      %p60 = por %p58, %p59
      %p61 = scmp.ne.s32.totalorder %s52, %s53
      %p62 = scmp.eq.s32.totalorder %s21, 0
      %p63 = por %p61, %p62
      %p64 = scmp.ne.s32.totalorder %s52, %s53
      %p65 = scmp.eq.s32.totalorder %s22, 1
      %p66 = por %p64, %p65
      %p68 = scmp.ne.s32.totalorder %s53, %s67
      %p69 = scmp.eq.s32.totalorder %s22, 0
      %p70 = por %p68, %p69
      %s72 = sadd.s32 %s71, 1
      %p75 = scmp.eq.s32.totalorder %s16, 1
      %p76 = scmp.ne.s32.totalorder %s71, %s73
      %p77 = scmp.eq.s32.totalorder %s16, 0
      %p78 = por %p76, %p77
      %p79 = scmp.ne.s32.totalorder %s71, %s73
      %p80 = scmp.eq.s32.totalorder %s21, 1
      %p81 = por %p79, %p80
      %p82 = scmp.ne.s32.totalorder %s73, %s74
      %p83 = scmp.eq.s32.totalorder %s21, 0
      %p84 = por %p82, %p83
      %p85 = scmp.ne.s32.totalorder %s73, %s74
      %p86 = scmp.eq.s32.totalorder %s22, 1
      %p87 = por %p85, %p86
      %p89 = scmp.ne.s32.totalorder %s74, %s88
      %p90 = scmp.eq.s32.totalorder %s22, 0
      %p91 = por %p89, %p90
      %s92 = ssub.s32 %s16, %s23
      %p93 = scmp.eq.s32.totalorder %s92, 0
      %s95 = sadd.s32 %s94, 1
      %s96 = scalar_select %p93, %s94, %s95
      %p99 = pneg %p93
      %p100 = scmp.eq.s32.totalorder %s16, 1
      %p101 = por %p99, %p100
      %p102 = scmp.ne.s32.totalorder %s94, %s97
      %p103 = scmp.eq.s32.totalorder %s16, 0
      %p104 = por %p102, %p103
      %p105 = scmp.ne.s32.totalorder %s94, %s97
      %p106 = scmp.eq.s32.totalorder %s21, 1
      %p107 = por %p105, %p106
      %p108 = scmp.ne.s32.totalorder %s97, %s98
      %p109 = scmp.eq.s32.totalorder %s21, 0
      %p110 = por %p108, %p109
      %p111 = scmp.ne.s32.totalorder %s97, %s98
      %p112 = scmp.eq.s32.totalorder %s22, 1
      %p113 = por %p111, %p112
      %p115 = scmp.ne.s32.totalorder %s98, %s114
      %p116 = scmp.eq.s32.totalorder %s22, 0
      %p117 = por %p115, %p116
      %p118 = scmp.le.s32.totalorder 1, %s16
      %p119 = scmp.lt.s32.totalorder %s16, 3
      %p120 = pnand %p118, %p119
      %p121 = pneg %p120
      // Predicated region
      $region9: #{tpu_custom_call.1} parent=5 // pred_check
        _
      $region10: #{tpu_custom_call.1} parent=5 // pred_check_branch
        %123 = sbr.rel (%p120) target = $region12
      $region11: #{tpu_custom_call.1} parent=5 // pred_region
        %s124 = ssub.s32 %s16, 1
        // Predicated region
        $region13: #{tpu_custom_call.1} parent=11 // pred_check
          %p125 = pneg %p63
        $region14: #{tpu_custom_call.1} parent=11 // pred_check_branch
          %127 = sbr.rel (%p125) target = $region16
        $region15: #{tpu_custom_call.1} parent=11 // pred_region
          %s129 = ssub.s32 1024, 1024
          %130 = vsyncadd [#allocation6], %s129
          %s131 = sshll.u32 [#allocation5], 4
          %s132 = int_to_ptr.vmem [resolvable:$true] %s131
          %137 = dma.hbm_to_vmem [thread:$0]  %s1, 1024, %s132, [#allocation6], 64, 64, 4
        $region16: #{tpu_custom_call.1} parent=11 // pred_fallthru
          _
        // Predicated region
        $region17: #{tpu_custom_call.1} parent=11 // pred_check
          %p138 = pneg %p84
        $region18: #{tpu_custom_call.1} parent=11 // pred_check_branch
          %140 = sbr.rel (%p138) target = $region20
        $region19: #{tpu_custom_call.1} parent=11 // pred_region
          %s142 = ssub.s32 512, 512
          %143 = vsyncadd [#allocation6], %s142
          %s144 = sshll.u32 [#allocation7], 4
          %s145 = int_to_ptr.vmem [resolvable:$true] %s144
          %150 = dma.hbm_to_vmem [thread:$0]  %s2, 512, %s145, [#allocation6], 128, 128, 8
        $region20: #{tpu_custom_call.1} parent=11 // pred_fallthru
          _
      $region12: #{tpu_custom_call.1} parent=5 // pred_fallthru
        _
      %p151 = scmp.lt.s32.totalorder %s16, 2
      // Predicated region
      $region21: #{tpu_custom_call.1} parent=5 // pred_check
        %p152 = pneg %p151
      $region22: #{tpu_custom_call.1} parent=5 // pred_check_branch
        %154 = sbr.rel (%p152) target = $region24
      $region23: #{tpu_custom_call.1} parent=5 // pred_region
        // Predicated region
        $region25: #{tpu_custom_call.1} parent=23 // pred_check
          %p155 = pneg %p36
        $region26: #{tpu_custom_call.1} parent=23 // pred_check_branch
          %157 = sbr.rel (%p155) target = $region28
        $region27: #{tpu_custom_call.1} parent=23 // pred_region
          %s158 = sand.u32 %s26, 1
          %s159 = scalar_lea.sflag [#allocation3], %s158
          %s160 = sand.u32 %s26, 1
          %s161 = smul.addr %s160, 16
          %s162 = scalar_lea.vmem [#allocation2], %s161
          %s164 = ssub.s32 256, 256
          %165 = vsyncadd %s159, %s164
          %s166 = smul.addr %s16, 4
          %s167 = smul.addr %s166, 64
          %s168 = scalar_lea.hbm %s0, %s167
          %s169 = sshll.u32 %s162, 4
          %s170 = int_to_ptr.vmem [resolvable:$true] %s169
          %175 = dma.hbm_to_vmem [thread:$0]  %s168, 256, %s170, %s159, 64, 64, 4
        $region28: #{tpu_custom_call.1} parent=23 // pred_fallthru
          _
      $region24: #{tpu_custom_call.1} parent=5 // pred_fallthru
        _
      %p176 = scmp.le.s32.totalorder 1, %s16
      %p177 = scmp.lt.s32.totalorder %s16, 3
      %p178 = pnand %p176, %p177
      %p179 = pneg %p178
      // Predicated region
      $region29: #{tpu_custom_call.1} parent=5 // pred_check
        _
      $region30: #{tpu_custom_call.1} parent=5 // pred_check_branch
        %181 = sbr.rel (%p178) target = $region32
      $region31: #{tpu_custom_call.1} parent=5 // pred_region
        %s182 = ssub.s32 %s16, 1
        %s183 = sand.u32 %s29, 1
        %s184 = scalar_lea.sflag [#allocation3], %s183
        %s185 = sand.u32 %s29, 1
        %s186 = smul.addr %s185, 16
        %s187 = scalar_lea.vmem [#allocation2], %s186
        // Predicated region
        $region33: #{tpu_custom_call.1} parent=31 // pred_check
          %p188 = pneg %p42
        $region34: #{tpu_custom_call.1} parent=31 // pred_check_branch
          %190 = sbr.rel (%p188) target = $region36
        $region35: #{tpu_custom_call.1} parent=31 // pred_region
          %191 = dma.done %s184, 256
        $region36: #{tpu_custom_call.1} parent=31 // pred_fallthru
          _
        // Predicated region
        $region37: #{tpu_custom_call.1} parent=31 // pred_check
          %p192 = pneg %p63
        $region38: #{tpu_custom_call.1} parent=31 // pred_check_branch
          %194 = sbr.rel (%p192) target = $region40
        $region39: #{tpu_custom_call.1} parent=31 // pred_region
          %195 = dma.done [#allocation6], 1024
        $region40: #{tpu_custom_call.1} parent=31 // pred_fallthru
          _
        // Predicated region
        $region41: #{tpu_custom_call.1} parent=31 // pred_check
          %p196 = pneg %p84
        $region42: #{tpu_custom_call.1} parent=31 // pred_check_branch
          %198 = sbr.rel (%p196) target = $region44
        $region43: #{tpu_custom_call.1} parent=31 // pred_region
          %199 = dma.done [#allocation6], 512
        $region44: #{tpu_custom_call.1} parent=31 // pred_fallthru
          _
        %s200 = sand.u32 %s29, 1
        %s201 = scalar_lea.sflag [#allocation3], %s200
        %s202 = sand.u32 %s29, 1
        %s203 = smul.addr %s202, 16
        %s204 = scalar_lea.vmem [#allocation2], %s203
        %p205 = pneg %p42
        %p206 = pneg %p39
        %p207 = pneg %p63
        %p208 = pneg %p60
        %p209 = pneg %p84
        %p210 = pneg %p81
        %p211 = pneg %p110
        %p212 = pneg %p107
        %s213 = sand.u32 %s97, 1
        %s214 = scalar_lea.sflag [#allocation4], %s213
        %s215 = sand.u32 %s97, 1
        %s216 = smul.addr %s215, 32
        %s217 = scalar_lea.vmem [#allocation8], %s216
        %v219 = vld [vmem:[%s187] sm:$0xf]
        %v220 = vld [vmem:[%s187 + $0x4] sm:$0xf]
        %v221 = vld [vmem:[%s187 + $0x8] sm:$0xf]
        %v222 = vld [vmem:[%s187 + $0xc] sm:$0xf]
        %v223 = vld [vmem:[#allocation5] sm:$0xf]
        %v224 = vld [vmem:[#allocation5 + $0x4] sm:$0xf]
        %v225 = vld [vmem:[#allocation5 + $0x8] sm:$0xf]
        %v226 = vld [vmem:[#allocation5 + $0xc] sm:$0xf]
        %v227 = vld [vmem:[#allocation5 + $0x10] sm:$0xf]
        %v228 = vld [vmem:[#allocation5 + $0x14] sm:$0xf]
        %v229 = vld [vmem:[#allocation5 + $0x18] sm:$0xf]
        %v230 = vld [vmem:[#allocation5 + $0x1c] sm:$0xf]
        %v231 = vld [vmem:[#allocation5 + $0x20] sm:$0xf]
        %v232 = vld [vmem:[#allocation5 + $0x24] sm:$0xf]
        %v233 = vld [vmem:[#allocation5 + $0x28] sm:$0xf]
        %v234 = vld [vmem:[#allocation5 + $0x2c] sm:$0xf]
        %v235 = vld [vmem:[#allocation5 + $0x30] sm:$0xf]
        %v236 = vld [vmem:[#allocation5 + $0x34] sm:$0xf]
        %v237 = vld [vmem:[#allocation5 + $0x38] sm:$0xf]
        %v238 = vld [vmem:[#allocation5 + $0x3c] sm:$0xf]
        %v243 = vunpack.c.l.b16 %v219
        %v244 = vunpack.c.l.b16 %v220
        %v245 = vunpack.c.l.b16 %v221
        %v246 = vunpack.c.l.b16 %v222
        %v247 = vpack.c.b16 %v244, %v243
        %v248 = vpack.c.b16 %v246, %v245
        %v267 = vunpack.c.l.b16 %v223
        %v268 = vunpack.c.l.b16 %v224
        %v269 = vunpack.c.l.b16 %v225
        %v270 = vunpack.c.l.b16 %v226
        %v271 = vunpack.c.l.b16 %v227
        %v272 = vunpack.c.l.b16 %v228
        %v273 = vunpack.c.l.b16 %v229
        %v274 = vunpack.c.l.b16 %v230
        %v275 = vunpack.c.l.b16 %v231
        %v276 = vunpack.c.l.b16 %v232
        %v277 = vunpack.c.l.b16 %v233
        %v278 = vunpack.c.l.b16 %v234
        %v279 = vunpack.c.l.b16 %v235
        %v280 = vunpack.c.l.b16 %v236
        %v281 = vunpack.c.l.b16 %v237
        %v282 = vunpack.c.l.b16 %v238
        %v283 = vpack.c.b16 %v268, %v267
        %v284 = vpack.c.b16 %v270, %v269
        %v285 = vpack.c.b16 %v272, %v271
        %v286 = vpack.c.b16 %v274, %v273
        %v287 = vpack.c.b16 %v276, %v275
        %v288 = vpack.c.b16 %v278, %v277
        %v289 = vpack.c.b16 %v280, %v279
        %v290 = vpack.c.b16 %v282, %v281
        %299 = vmatprep.subr.bf16.mxu0 0
        %300 = vmatpush1.bf16.msra.mxu0 %v283
        %301 = vmatprep.subr.bf16.mxu0 0
        %302 = vmatpush1.bf16.msra.mxu0 %v284
        %303 = vmatprep.subr.bf16.mxu0 0
        %304 = vmatpush1.bf16.msra.mxu0 %v285
        %305 = vmatprep.subr.bf16.mxu0 0
        %306 = vmatpush1.bf16.msra.mxu0 %v286
        %307 = vmatprep.subr.bf16.mxu0 0
        %308 = vmatpush1.bf16.msra.mxu0 %v287
        %309 = vmatprep.subr.bf16.mxu0 0
        %310 = vmatpush1.bf16.msra.mxu0 %v288
        %311 = vmatprep.subr.bf16.mxu0 0
        %312 = vmatpush1.bf16.msra.mxu0 %v289
        %313 = vmatprep.subr.bf16.mxu0 0
        %314 = vmatpush1.bf16.msra.mxu0 %v290
        %315 = vmatprep.subr.bf16.mxu0 0
        %316 = vmatpush1.bf16.msra.mxu0 0
        %317 = vmatprep.subr.bf16.mxu0 0
        %318 = vmatpush1.bf16.msra.mxu0 0
        %319 = vmatprep.subr.bf16.mxu0 0
        %320 = vmatpush1.bf16.msra.mxu0 0
        %321 = vmatprep.subr.bf16.mxu0 0
        %322 = vmatpush1.bf16.msra.mxu0 0
        %323 = vmatprep.subr.bf16.mxu0 0
        %324 = vmatpush1.bf16.msra.mxu0 0
        %325 = vmatprep.subr.bf16.mxu0 0
        %326 = vmatpush1.bf16.msra.mxu0 0
        %327 = vmatprep.subr.bf16.mxu0 0
        %328 = vmatpush1.bf16.msra.mxu0 0
        %329 = vmatprep.subr.bf16.mxu0 0
        %330 = vmatpush1.bf16.msra.mxu0 0
        %331 = vmatprep.mubr.bf16.mxu0 0
        %332 = vmatmul.mubr.bf16.gmra.mrb[0].mxu0 %v247
        %v333 = vpop.f32.mrb[0].mxu0
        %v334 = vadd.f32 0.0, %v333
        %v335 = vpop.f32.mrb[0].mxu0
        %v336 = vpop.f32.mrb[0].mxu0
        %v337 = vadd.f32 0.0, %v336
        %v338 = vpop.f32.mrb[0].mxu0
        %339 = vmatprep.mubr.bf16.mxu0 0
        %340 = vmatmul.mubr.bf16.gmra.mrb[0].mxu0 %v248
        %v341 = vpop.f32.mrb[0].mxu0
        %v342 = vadd.f32 0.0, %v341
        %v343 = vpop.f32.mrb[0].mxu0
        %v344 = vpop.f32.mrb[0].mxu0
        %v345 = vadd.f32 0.0, %v344
        %v346 = vpop.f32.mrb[0].mxu0
        %347 = vdwg.mxu0
        %v348 = vld [vmem:[#allocation7] sm:$0xff]
        %v349 = vld [vmem:[#allocation7 + $0x8] sm:$0xff]
        %v350 = vld [vmem:[#allocation7 + $0x10] sm:$0xff]
        %v351 = vld [vmem:[#allocation7 + $0x18] sm:$0xff]
        %v352 = vadd.f32 %v334, %v348
        %v353 = vadd.f32 %v337, %v349
        %v354 = vadd.f32 %v342, %v350
        %v355 = vadd.f32 %v345, %v351
        %356 = vst [vmem:[%s217] sm:$0xff] %v352
        %357 = vst [vmem:[%s217 + $0x8] sm:$0xff] %v353
        %358 = vst [vmem:[%s217 + $0x10] sm:$0xff] %v354
        %359 = vst [vmem:[%s217 + $0x18] sm:$0xff] %v355
        %s360 = sand.u32 %s97, 1
        %s361 = scalar_lea.sflag [#allocation4], %s360
        %s362 = sand.u32 %s97, 1
        %s363 = smul.addr %s362, 32
        %s364 = scalar_lea.vmem [#allocation8], %s363
        // Predicated region
        $region45: #{tpu_custom_call.1} parent=31 // pred_check
          %p365 = pneg %p107
        $region46: #{tpu_custom_call.1} parent=31 // pred_check_branch
          %367 = sbr.rel (%p365) target = $region48
        $region47: #{tpu_custom_call.1} parent=31 // pred_region
          %s369 = ssub.s32 512, 512
          %370 = vsyncadd %s361, %s369
          %s371 = smul.addr %s21, 4
          %s372 = smul.addr %s371, 128
          %s373 = scalar_lea.hbm %s3, %s372
          %s374 = sshll.u32 %s364, 4
          %s375 = int_to_ptr.vmem [resolvable:$true] %s374
          %380 = dma.vmem_to_hbm [thread:$0]  %s375, 512, %s373, %s361, 128, 128, 8
        $region48: #{tpu_custom_call.1} parent=31 // pred_fallthru
          _
      $region32: #{tpu_custom_call.1} parent=5 // pred_fallthru
        _
      %p381 = scmp.le.s32.totalorder 2, %s16
      // Predicated region
      $region49: #{tpu_custom_call.1} parent=5 // pred_check
        %p382 = pneg %p381
      $region50: #{tpu_custom_call.1} parent=5 // pred_check_branch
        %384 = sbr.rel (%p382) target = $region52
      $region51: #{tpu_custom_call.1} parent=5 // pred_region
        %s385 = ssub.s32 %s16, 2
        // Predicated region
        $region53: #{tpu_custom_call.1} parent=51 // pred_check
          %p386 = pneg %p113
        $region54: #{tpu_custom_call.1} parent=51 // pred_check_branch
          %388 = sbr.rel (%p386) target = $region56
        $region55: #{tpu_custom_call.1} parent=51 // pred_region
          %s389 = sand.u32 %s98, 1
          %s390 = scalar_lea.sflag [#allocation4], %s389
          %s391 = sand.u32 %s98, 1
          %s392 = smul.addr %s391, 32
          %s393 = scalar_lea.vmem [#allocation8], %s392
          %394 = dma.done %s390, 512
        $region56: #{tpu_custom_call.1} parent=51 // pred_fallthru
          _
      $region52: #{tpu_custom_call.1} parent=5 // pred_fallthru
        _
    $region6: #{tpu_custom_call.1} parent=1 // loop_footer
      %s20 = sadd.s32 1, %s16
    $region7: #{tpu_custom_call.1} parent=1 // loop_footer_branch
      %15 = sbr.rel target = $region3
    $region8: #{tpu_custom_call.1} parent=1 // loop_exit
      _
    %395 = vsyncpa [#allocation3], 1
    %s396 = scalar_lea.sflag [#allocation3], 1
    %397 = vsyncpa %s396, 1
    %398 = vsyncpa [#allocation6], 1
    %399 = vsyncpa [#allocation4], 1
    %s400 = scalar_lea.sflag [#allocation4], 1
    %401 = vsyncpa %s400, 1

</llo_original>
